<compile_context>
chip_gen: v6e
topology: v6e:2x2x1
jax: 0.10.0
libtpu: 0.0.40
codegen_flags: <defaults>
</compile_context>

<pallas_src>
import functools

import jax
import jax.numpy as jnp
import numpy as np
from jax.experimental import pallas as pl
from jax.experimental.pallas import tpu as pltpu

GLM_SCALE = 1.5          # fixed scale of the logistic baseline distribution
LEAKY_SLOPE = 0.01       # nn.LeakyReLU default negative_slope


def _round_up(n, m):
    return ((n + m - 1) // m) * m


def drn_kernel(xt_ref, sp_ref, w1_ref, w2_ref, wo_ref, b0_ref, out_ref,
               *, seg_off, R, Rp):
    """All tensors are laid out with the batch on the LANE axis.

    xt_ref : (F, TB)   input features, batch on lanes
    sp_ref : (P, 1)    packed small parameters (cut_lo_s/cut_hi_s/bo/beta/b1/b2)
    w1_ref : (H, F), w2_ref : (H, H), wo_ref : (R, H)   PyTorch (out, in) layout
    b0_ref : (1, 1)    GLM intercept, in SMEM
    out_ref: (2*Rp + 8, TB) packed output block:
             rows [0:R) = baseline probs, [Rp:Rp+R) = drn pmf, [2*Rp:2*Rp+8) = mu
    """
    F = xt_ref.shape[0]
    H = w1_ref.shape[0]
    TB = xt_ref.shape[1]

    xt = xt_ref[...]                                             # (F, TB)
    b0 = b0_ref[0, 0]                                            # scalar (SMEM)

    # ----- GLM baseline location: VPU multiply + sublane reduce (no MXU) -----
    beta = sp_ref[seg_off["beta"]:seg_off["beta"] + F, :]        # (F, 1)
    mu = jnp.sum(xt * beta, axis=0, keepdims=True) + b0          # (1, TB)
    mu_s = mu * (1.0 / GLM_SCALE)                                # scaled once

    # ----- per-region baseline probabilities (cutpoints pre-scaled by 1/s) ---
    cut_lo_s = sp_ref[seg_off["cut_lo"]:seg_off["cut_lo"] + R, :]  # (R, 1)
    cut_hi_s = sp_ref[seg_off["cut_hi"]:seg_off["cut_hi"] + R, :]  # (R, 1)
    probs = (jax.nn.sigmoid(cut_hi_s - mu_s)
             - jax.nn.sigmoid(cut_lo_s - mu_s))                  # (R, TB)

    mass = jnp.sum(probs, axis=0, keepdims=True)                 # (1, TB)
    probs = jnp.clip(probs, 1e-10, 1.0)
    # one (approx) reciprocal per column instead of R broadcast divides; the
    # rescale factor is per-column so it cancels exactly in the softmax below.
    scale = mass * pl.reciprocal(jnp.sum(probs, axis=0, keepdims=True),
                                 approx=True)                    # (1, TB)
    probs = probs * scale

    # ----- log_adjustments MLP (LeakyReLU; dropout = identity at eval) -----
    b1 = sp_ref[seg_off["b1"]:seg_off["b1"] + H, :]              # (H, 1)
    b2 = sp_ref[seg_off["b2"]:seg_off["b2"] + H, :]              # (H, 1)
    bo = sp_ref[seg_off["bo"]:seg_off["bo"] + R, :]              # (R, 1)

    h = jnp.dot(w1_ref[...], xt, preferred_element_type=jnp.float32) + b1
    h = jnp.maximum(h, LEAKY_SLOPE * h)
    h = jnp.dot(w2_ref[...], h, preferred_element_type=jnp.float32) + b2
    h = jnp.maximum(h, LEAKY_SLOPE * h)
    adj = jnp.dot(wo_ref[...], h, preferred_element_type=jnp.float32) + bo

    # ----- log-free region softmax: softmax(log(probs)+adj) == normalize(probs*exp(adj))
    m = jnp.max(adj, axis=0, keepdims=True)                      # (1, TB)
    num = probs * jnp.exp(adj - m)                               # (R, TB), <= 1
    pmf = num * pl.reciprocal(jnp.sum(num, axis=0, keepdims=True),
                              approx=False)                      # exact divide

    # ----- packed, 8-row-aligned, full-lane-width stores -----
    out_ref[0:R, :] = probs.astype(out_ref.dtype)
    out_ref[Rp:Rp + R, :] = pmf.astype(out_ref.dtype)
    out_ref[2 * Rp:2 * Rp + 8, :] = jnp.broadcast_to(mu, (8, TB)).astype(out_ref.dtype)


def _pack_small(cutpoints, params, F, H, R):
    """Pack all small column parameters into one (P, 1) f32 blob.

    Segments are 8-row aligned so in-kernel static slices stay sublane-aligned.
    Cutpoints are pre-scaled by 1/GLM_SCALE (folded constant).
    """
    def col(v, rows):
        v = jnp.asarray(v, jnp.float32).reshape(-1, 1)
        return jnp.pad(v, ((0, rows - v.shape[0]), (0, 0)))

    inv_s = 1.0 / GLM_SCALE
    cp = jnp.asarray(cutpoints, jnp.float32)
    Rp, Fp, Hp = _round_up(R, 8), _round_up(F, 8), _round_up(H, 8)
    layout = [
        ("cut_lo", cp[:-1] * inv_s, Rp),
        ("cut_hi", cp[1:] * inv_s, Rp),
        ("bo", params["bo"], Rp),
        ("beta", params["beta"], Fp),
        ("b1", params["b1"], Hp),
        ("b2", params["b2"], Hp),
    ]
    seg_off, parts, off = {}, [], 0
    for name, v, rows in layout:
        seg_off[name] = off
        parts.append(col(v, rows))
        off += rows
    return jnp.concatenate(parts, axis=0), seg_off


@functools.partial(jax.jit, static_argnames=("block_b", "out_dtype"))
def drn_forward(x, cutpoints, params, block_b=512, out_dtype=jnp.float32):
    """Returns (mu, cutpoints, baseline_probs, drn_pmf) — mirroring the torch
    module's (baseline_dists, cutpoints, baseline_probs, drn_pmf)."""
    B, F = x.shape
    K = cutpoints.shape[0]
    R = K - 1
    Rp = _round_up(R, 8)
    H = params["w1"].shape[0]
    OUT_ROWS = 2 * Rp + 8

    # --- batch tiling: always 128-multiple lane tiles, >= 2 grid steps when
    # --- B allows (pipelining + v7x dual-core), capped at block_b (<= 512-1024
    # --- keeps intermediates near the 64-vreg file).
    assert block_b % 128 == 0, "block_b must be a multiple of 128"
    B128 = _round_up(B, 128)
    if B128 >= 2 * block_b:
        TB = block_b
    else:
        TB = max(128, _round_up(pl.cdiv(B128, 2), 128))
    B_pad = _round_up(B128, TB)
    grid = (B_pad // TB,)

    # Lane-dense layout: batch on lanes, zero-padded to B_pad (pad lanes stay
    # finite through the whole kernel and are sliced off below).
    xt = jnp.asarray(x, jnp.float32).T                           # (F, B)
    xt = jnp.pad(xt, ((0, 0), (0, B_pad - B)))                   # (F, B_pad)
    small, seg_off = _pack_small(cutpoints, params, F, H, R)     # (P, 1)
    b0 = jnp.asarray(params["b0"], jnp.float32).reshape(1, 1)    # SMEM scalar

    kernel = functools.partial(drn_kernel, seg_off=seg_off, R=R, Rp=Rp)
    out_isize = jnp.dtype(out_dtype).itemsize

    out = pl.pallas_call(
        kernel,
        grid=grid,
        in_specs=[
            pl.BlockSpec((F, TB), lambda i: (0, i)),             # x tile (pipelined)
            pl.BlockSpec(small.shape, lambda i: (0, 0)),         # resident params
            pl.BlockSpec(params["w1"].shape, lambda i: (0, 0)),  # resident weights
            pl.BlockSpec(params["w2"].shape, lambda i: (0, 0)),
            pl.BlockSpec(params["wo"].shape, lambda i: (0, 0)),
            pl.BlockSpec(memory_space=pltpu.MemorySpace.SMEM),   # b0 scalar
        ],
        out_specs=pl.BlockSpec((OUT_ROWS, TB), lambda i: (0, i)),
        out_shape=jax.ShapeDtypeStruct((OUT_ROWS, B_pad), out_dtype),
        compiler_params=pltpu.CompilerParams(
            dimension_semantics=("parallel",)),
        cost_estimate=pl.CostEstimate(
            flops=int(2 * B_pad * (F * H + H * H + H * R + F) + 12 * B_pad * R),
            transcendentals=int(B_pad * (3 * R + 3)),
            bytes_accessed=int(4 * (B_pad * F + small.size
                                    + F * H + H * H + H * R + 1)
                               + out_isize * OUT_ROWS * B_pad),
        ),
    )(xt, small, params["w1"], params["w2"], params["wo"], b0)

    # Split the packed block and transpose back to the module's (B, ...) layout.
    probs = out[0:R, :B].T.astype(jnp.float32)
    pmf = out[Rp:Rp + R, :B].T.astype(jnp.float32)
    mu = out[2 * Rp, :B].astype(jnp.float32).reshape(B, 1)
    return mu, cutpoints, probs, pmf


def drn_forward_ref(x, cutpoints, params):
    """Pure-JAX reference of the same forward pass (for validation)."""
    mu = (x @ jnp.asarray(params["beta"]).reshape(-1, 1)) + params["b0"]
    cdfs = jax.nn.sigmoid((cutpoints[None, :] - mu) / GLM_SCALE)
    probs = cdfs[:, 1:] - cdfs[:, :-1]
    mass = jnp.sum(probs, axis=1, keepdims=True)
    probs = jnp.clip(probs, 1e-10, 1.0)
    probs = probs / jnp.sum(probs, axis=1, keepdims=True) * mass
    h = x @ params["w1"].T + params["b1"]
    h = jnp.where(h > 0, h, LEAKY_SLOPE * h)
    h = h @ params["w2"].T + params["b2"]
    h = jnp.where(h > 0, h, LEAKY_SLOPE * h)
    adj = h @ params["wo"].T + params["bo"]
    logits = jnp.log(probs) + adj
    pmf = jax.nn.softmax(logits, axis=1)
    return mu, cutpoints, probs, pmf


def init_params(key, num_features, hidden_size, num_regions):
    ks = jax.random.split(key, 8)

    def lin_w(k, fan_in, fan_out):      # PyTorch (out_features, in_features)
        bound = 1.0 / np.sqrt(fan_in)
        return jax.random.uniform(k, (fan_out, fan_in), jnp.float32, -bound, bound)

    return {
        # GLM parameters (synthetic, deterministic)
        "beta": jax.random.normal(ks[0], (num_features,), jnp.float32) * 0.5,
        "b0":   jnp.float32(0.3),
        # hidden_layers: Linear(F,H) -> LeakyReLU -> Dropout -> Linear(H,H) -> LeakyReLU -> Dropout
        "w1": lin_w(ks[1], num_features, hidden_size),
        "b1": jax.random.uniform(ks[2], (hidden_size,), jnp.float32, -0.1, 0.1),
        "w2": lin_w(ks[3], hidden_size, hidden_size),
        "b2": jax.random.uniform(ks[4], (hidden_size,), jnp.float32, -0.1, 0.1),
        # fc_output: Linear(H, num_regions)
        "wo": lin_w(ks[5], hidden_size, num_regions),
        "bo": jax.random.uniform(ks[6], (num_regions,), jnp.float32, -0.1, 0.1),
    }


def _check(x, cutpoints, params, block_b=512):
    B = x.shape[0]
    R = cutpoints.shape[0] - 1
    mu, _, baseline_probs, drn_pmf = drn_forward(x, cutpoints, params,
                                                 block_b=block_b)
    jax.block_until_ready(drn_pmf)

    mu_r, _, probs_r, pmf_r = drn_forward_ref(x, cutpoints, params)
    assert baseline_probs.shape == (B, R) and drn_pmf.shape == (B, R)
    np.testing.assert_allclose(np.asarray(mu), np.asarray(mu_r),
                               rtol=1e-4, atol=1e-5)
    # approx reciprocal on the baseline rescale -> slightly looser tolerance
    np.testing.assert_allclose(np.asarray(baseline_probs), np.asarray(probs_r),
                               rtol=5e-3, atol=1e-6)
    np.testing.assert_allclose(np.asarray(drn_pmf), np.asarray(pmf_r),
                               rtol=5e-3, atol=1e-6)
    # exact reciprocal on the softmax denominator -> rows sum to 1 tightly
    np.testing.assert_allclose(np.asarray(jnp.sum(drn_pmf, axis=1)),
                               np.ones(B, np.float32), rtol=0, atol=1e-4)


if __name__ == "__main__":
    # Small shapes consistent with the module's forward:
    # tabular rows, 4 features, 2 hidden layers of 32, 9 cutpoints -> 8 regions.
    F, H, K = 4, 32, 9
    R = K - 1

    key = jax.random.PRNGKey(0)
    kx, kp, kx2, kx3 = jax.random.split(key, 4)
    cutpoints = jnp.linspace(-3.0, 3.0, K).astype(jnp.float32)
    params = init_params(kp, F, H, R)

    # 1) tiny batch: padded to one full 128-lane tile, grid=(1,)
    _check(jax.random.normal(kx, (8, F), jnp.float32), cutpoints, params)

    # 2) batch not a multiple of 128: padded lanes + 2-step grid
    _check(jax.random.normal(kx2, (300, F), jnp.float32), cutpoints, params)

    # 3) bigger batch: multi-step pipelined grid with TB=512 (resident weights)
    _check(jax.random.normal(kx3, (1200, F), jnp.float32), cutpoints, params)

    print("KERNEL_OK")
</pallas_src>

<mosaic_0001>
module attributes {stable_mosaic.version = 11 : i64} {
  func.func @drn_kernel(%arg0: i32, %arg1: memref<4x128xf32, #tpu.memory_space<vmem>>, %arg2: memref<96x1xf32, #tpu.memory_space<vmem>>, %arg3: memref<32x4xf32, #tpu.memory_space<vmem>>, %arg4: memref<32x32xf32, #tpu.memory_space<vmem>>, %arg5: memref<8x32xf32, #tpu.memory_space<vmem>>, %arg6: memref<1x1xf32, #tpu.memory_space<smem>>, %arg7: memref<24x128xf32, #tpu.memory_space<vmem>>) attributes {dimension_semantics = [#tpu.dimension_semantics<parallel>], iteration_bounds = array<i64: 1>, scalar_prefetch = 0 : i64, scratch_operands = 0 : i64, tpu.core_type = #tpu.core_type<tc>, window_params = [{transform_indices = @transform_0, window_bounds = array<i64: 4, 128>}, {pipeline_mode = #tpu.pipeline_mode<synchronous>, transform_indices = @transform_1, window_bounds = array<i64: 96, 1>}, {pipeline_mode = #tpu.pipeline_mode<synchronous>, transform_indices = @transform_2, window_bounds = array<i64: 32, 4>}, {pipeline_mode = #tpu.pipeline_mode<synchronous>, transform_indices = @transform_3, window_bounds = array<i64: 32, 32>}, {pipeline_mode = #tpu.pipeline_mode<synchronous>, transform_indices = @transform_4, window_bounds = array<i64: 8, 32>}, {transform_indices = @transform_5, window_bounds = array<i64: 1, 1>}, {transform_indices = @transform_6, window_bounds = array<i64: 24, 128>}]} {
    %c0 = arith.constant 0 : index
    %c0_0 = arith.constant 0 : index
    %0 = vector.load %arg1[%c0, %c0_0] : memref<4x128xf32, #tpu.memory_space<vmem>>, vector<4x128xf32>
    %c0_1 = arith.constant 0 : index
    %c0_2 = arith.constant 0 : index
    %1 = memref.load %arg6[%c0_1, %c0_2] : memref<1x1xf32, #tpu.memory_space<smem>>
    %c24 = arith.constant 24 : index
    %c0_3 = arith.constant 0 : index
    %2 = vector.load %arg2[%c24, %c0_3] : memref<96x1xf32, #tpu.memory_space<vmem>>, vector<4x1xf32>
    %3 = vector.broadcast %2 : vector<4x1xf32> to vector<4x128xf32>
    %4 = arith.mulf %0, %3 : vector<4x128xf32>
    %cst = arith.constant dense<0.000000e+00> : vector<128xf32>
    %5 = vector.multi_reduction <add>, %4, %cst [0] : vector<4x128xf32> to vector<128xf32>
    %6 = vector.shape_cast %5 : vector<128xf32> to vector<1x128xf32>
    %7 = vector.broadcast %1 : f32 to vector<1x128xf32>
    %8 = arith.addf %6, %7 : vector<1x128xf32>
    %cst_4 = arith.constant 0.666666686 : f32
    %9 = vector.broadcast %cst_4 : f32 to vector<1x128xf32>
    %10 = arith.mulf %8, %9 : vector<1x128xf32>
    %c0_5 = arith.constant 0 : index
    %c0_6 = arith.constant 0 : index
    %11 = vector.load %arg2[%c0_5, %c0_6] : memref<96x1xf32, #tpu.memory_space<vmem>>, vector<8x1xf32>
    %c8 = arith.constant 8 : index
    %c0_7 = arith.constant 0 : index
    %12 = vector.load %arg2[%c8, %c0_7] : memref<96x1xf32, #tpu.memory_space<vmem>>, vector<8x1xf32>
    %13 = vector.broadcast %12 : vector<8x1xf32> to vector<8x128xf32>
    %14 = vector.broadcast %10 : vector<1x128xf32> to vector<8x128xf32>
    %15 = arith.subf %13, %14 : vector<8x128xf32>
    %16 = arith.negf %15 : vector<8x128xf32>
    %17 = math.exp %16 : vector<8x128xf32>
    %cst_8 = arith.constant 1.000000e+00 : f32
    %18 = vector.broadcast %cst_8 : f32 to vector<8x128xf32>
    %19 = arith.addf %18, %17 : vector<8x128xf32>
    %20 = arith.divf %18, %19 : vector<8x128xf32>
    %21 = vector.broadcast %11 : vector<8x1xf32> to vector<8x128xf32>
    %22 = vector.broadcast %10 : vector<1x128xf32> to vector<8x128xf32>
    %23 = arith.subf %21, %22 : vector<8x128xf32>
    %24 = arith.negf %23 : vector<8x128xf32>
    %25 = math.exp %24 : vector<8x128xf32>
    %cst_9 = arith.constant 1.000000e+00 : f32
    %26 = vector.broadcast %cst_9 : f32 to vector<8x128xf32>
    %27 = arith.addf %26, %25 : vector<8x128xf32>
    %28 = arith.divf %26, %27 : vector<8x128xf32>
    %29 = arith.subf %20, %28 : vector<8x128xf32>
    %cst_10 = arith.constant dense<0.000000e+00> : vector<128xf32>
    %30 = vector.multi_reduction <add>, %29, %cst_10 [0] : vector<8x128xf32> to vector<128xf32>
    %31 = vector.shape_cast %30 : vector<128xf32> to vector<1x128xf32>
    %cst_11 = arith.constant 1.000000e-10 : f32
    %cst_12 = arith.constant 1.000000e+00 : f32
    %32 = vector.broadcast %cst_11 : f32 to vector<8x128xf32>
    %33 = arith.maximumf %32, %29 : vector<8x128xf32>
    %34 = vector.broadcast %cst_12 : f32 to vector<8x128xf32>
    %35 = arith.minimumf %34, %33 : vector<8x128xf32>
    %cst_13 = arith.constant dense<0.000000e+00> : vector<128xf32>
    %36 = vector.multi_reduction <add>, %35, %cst_13 [0] : vector<8x128xf32> to vector<128xf32>
    %37 = vector.shape_cast %36 : vector<128xf32> to vector<1x128xf32>
    %38 = tpu.reciprocal %37 {approx = true} : vector<1x128xf32> -> vector<1x128xf32>
    %39 = arith.mulf %31, %38 : vector<1x128xf32>
    %40 = vector.broadcast %39 : vector<1x128xf32> to vector<8x128xf32>
    %41 = arith.mulf %35, %40 : vector<8x128xf32>
    %c32 = arith.constant 32 : index
    %c0_14 = arith.constant 0 : index
    %42 = vector.load %arg2[%c32, %c0_14] : memref<96x1xf32, #tpu.memory_space<vmem>>, vector<32x1xf32>
    %c64 = arith.constant 64 : index
    %c0_15 = arith.constant 0 : index
    %43 = vector.load %arg2[%c64, %c0_15] : memref<96x1xf32, #tpu.memory_space<vmem>>, vector<32x1xf32>
    %c16 = arith.constant 16 : index
    %c0_16 = arith.constant 0 : index
    %44 = vector.load %arg2[%c16, %c0_16] : memref<96x1xf32, #tpu.memory_space<vmem>>, vector<8x1xf32>
    %c0_17 = arith.constant 0 : index
    %c0_18 = arith.constant 0 : index
    %45 = vector.load %arg3[%c0_17, %c0_18] : memref<32x4xf32, #tpu.memory_space<vmem>>, vector<32x4xf32>
    %cst_19 = arith.constant dense<0.000000e+00> : vector<32x128xf32>
    %46 = tpu.matmul %45, %0, %cst_19 {dimension_numbers = #tpu.dot_dimension_numbers<[1], [0], [0], [1], [0, 0, 1, 1], [], []>} : vector<32x4xf32>, vector<4x128xf32>, vector<32x128xf32> -> vector<32x128xf32>
    %47 = vector.broadcast %42 : vector<32x1xf32> to vector<32x128xf32>
    %48 = arith.addf %46, %47 : vector<32x128xf32>
    %cst_20 = arith.constant 0.00999999977 : f32
    %49 = vector.broadcast %cst_20 : f32 to vector<32x128xf32>
    %50 = arith.mulf %49, %48 : vector<32x128xf32>
    %51 = arith.maximumf %48, %50 : vector<32x128xf32>
    %c0_21 = arith.constant 0 : index
    %c0_22 = arith.constant 0 : index
    %52 = vector.load %arg4[%c0_21, %c0_22] : memref<32x32xf32, #tpu.memory_space<vmem>>, vector<32x32xf32>
    %cst_23 = arith.constant dense<0.000000e+00> : vector<32x128xf32>
    %53 = tpu.matmul %52, %51, %cst_23 {dimension_numbers = #tpu.dot_dimension_numbers<[1], [0], [0], [1], [0, 0, 1, 1], [], []>} : vector<32x32xf32>, vector<32x128xf32>, vector<32x128xf32> -> vector<32x128xf32>
    %54 = vector.broadcast %43 : vector<32x1xf32> to vector<32x128xf32>
    %55 = arith.addf %53, %54 : vector<32x128xf32>
    %cst_24 = arith.constant 0.00999999977 : f32
    %56 = vector.broadcast %cst_24 : f32 to vector<32x128xf32>
    %57 = arith.mulf %56, %55 : vector<32x128xf32>
    %58 = arith.maximumf %55, %57 : vector<32x128xf32>
    %c0_25 = arith.constant 0 : index
    %c0_26 = arith.constant 0 : index
    %59 = vector.load %arg5[%c0_25, %c0_26] : memref<8x32xf32, #tpu.memory_space<vmem>>, vector<8x32xf32>
    %cst_27 = arith.constant dense<0.000000e+00> : vector<8x128xf32>
    %60 = tpu.matmul %59, %58, %cst_27 {dimension_numbers = #tpu.dot_dimension_numbers<[1], [0], [0], [1], [0, 0, 1, 1], [], []>} : vector<8x32xf32>, vector<32x128xf32>, vector<8x128xf32> -> vector<8x128xf32>
    %61 = vector.broadcast %44 : vector<8x1xf32> to vector<8x128xf32>
    %62 = arith.addf %60, %61 : vector<8x128xf32>
    %cst_28 = arith.constant dense<0xFF800000> : vector<128xf32>
    %63 = vector.multi_reduction <maximumf>, %62, %cst_28 [0] : vector<8x128xf32> to vector<128xf32>
    %64 = vector.shape_cast %63 : vector<128xf32> to vector<1x128xf32>
    %65 = vector.broadcast %64 : vector<1x128xf32> to vector<8x128xf32>
    %66 = arith.subf %62, %65 : vector<8x128xf32>
    %67 = math.exp %66 : vector<8x128xf32>
    %68 = arith.mulf %41, %67 : vector<8x128xf32>
    %cst_29 = arith.constant dense<0.000000e+00> : vector<128xf32>
    %69 = vector.multi_reduction <add>, %68, %cst_29 [0] : vector<8x128xf32> to vector<128xf32>
    %70 = vector.shape_cast %69 : vector<128xf32> to vector<1x128xf32>
    %71 = tpu.reciprocal %70 : vector<1x128xf32> -> vector<1x128xf32>
    %72 = vector.broadcast %71 : vector<1x128xf32> to vector<8x128xf32>
    %73 = arith.mulf %68, %72 : vector<8x128xf32>
    %c0_30 = arith.constant 0 : index
    %c0_31 = arith.constant 0 : index
    %74 = vector.load %arg7[%c0_30, %c0_31] : memref<24x128xf32, #tpu.memory_space<vmem>>, vector<8x128xf32>
    tpu.vector_store %arg7[%c0_30, %c0_31], %41 {strides = array<i32>} : memref<24x128xf32, #tpu.memory_space<vmem>>, vector<8x128xf32>,
    %c8_32 = arith.constant 8 : index
    %c0_33 = arith.constant 0 : index
    %75 = vector.load %arg7[%c8_32, %c0_33] : memref<24x128xf32, #tpu.memory_space<vmem>>, vector<8x128xf32>
    tpu.vector_store %arg7[%c8_32, %c0_33], %73 {strides = array<i32>} : memref<24x128xf32, #tpu.memory_space<vmem>>, vector<8x128xf32>,
    %76 = vector.shape_cast %8 : vector<1x128xf32> to vector<1x128xf32>
    %77 = vector.broadcast %76 : vector<1x128xf32> to vector<8x128xf32>
    %c16_34 = arith.constant 16 : index
    %c0_35 = arith.constant 0 : index
    %78 = vector.load %arg7[%c16_34, %c0_35] : memref<24x128xf32, #tpu.memory_space<vmem>>, vector<8x128xf32>
    tpu.vector_store %arg7[%c16_34, %c0_35], %77 {strides = array<i32>} : memref<24x128xf32, #tpu.memory_space<vmem>>, vector<8x128xf32>,
    return
  }
  func.func @transform_0(%arg0: i32) -> (i32, i32) {
    %c0_i32 = arith.constant 0 : i32
    %c0_i32_0 = arith.constant 0 : i32
    return %c0_i32, %arg0 : i32, i32
  }
  func.func @transform_1(%arg0: i32) -> (i32, i32) {
    %c0_i32 = arith.constant 0 : i32
    %c0_i32_0 = arith.constant 0 : i32
    %c0_i32_1 = arith.constant 0 : i32
    return %c0_i32, %c0_i32_0 : i32, i32
  }
  func.func @transform_2(%arg0: i32) -> (i32, i32) {
    %c0_i32 = arith.constant 0 : i32
    %c0_i32_0 = arith.constant 0 : i32
    %c0_i32_1 = arith.constant 0 : i32
    return %c0_i32, %c0_i32_0 : i32, i32
  }
  func.func @transform_3(%arg0: i32) -> (i32, i32) {
    %c0_i32 = arith.constant 0 : i32
    %c0_i32_0 = arith.constant 0 : i32
    %c0_i32_1 = arith.constant 0 : i32
    return %c0_i32, %c0_i32_0 : i32, i32
  }
  func.func @transform_4(%arg0: i32) -> (i32, i32) {
    %c0_i32 = arith.constant 0 : i32
    %c0_i32_0 = arith.constant 0 : i32
    %c0_i32_1 = arith.constant 0 : i32
    return %c0_i32, %c0_i32_0 : i32, i32
  }
  func.func @transform_5(%arg0: i32) -> (i32, i32) {
    %c0_i32 = arith.constant 0 : i32
    %c0_i32_0 = arith.constant 0 : i32
    %c0_i32_1 = arith.constant 0 : i32
    return %c0_i32, %c0_i32_0 : i32, i32
  }
  func.func @transform_6(%arg0: i32) -> (i32, i32) {
    %c0_i32 = arith.constant 0 : i32
    %c0_i32_0 = arith.constant 0 : i32
    return %c0_i32, %arg0 : i32, i32
  }
}

</mosaic_0001>

<llo_original>
// kernel: drn_forward.1
$region0: #{drn_forward.1}
  #allocation0 [shape = 'u32[]', space=smem, size = 0x4, offset = 0x4, fixed_abs, tag = 'smem constant byte address 0x4 - core index']
  #allocation1 [shape = 'u32[144,128]{1,0:T(1,128)}', space=vmem, size = 0x12000, scoped, tag = 'internal scratch']
  #allocation2 [shape = 'f32[1,1]{1,0:T(1,128)S(6)}', space=smem, size = 0x200, scoped, tag = 'scoped memory for drn_forward.1']
  %s0 = inlined_call_operand.vmem [shape: f32[4,128], index: 0, kind: input, shape index: {}]
  %s1 = inlined_call_operand.vmem [shape: f32[96,1], index: 1, kind: input, shape index: {}]
  %s2 = inlined_call_operand.vmem [shape: f32[32,4], index: 2, kind: input, shape index: {}]
  %s3 = inlined_call_operand.vmem [shape: f32[32,32], index: 3, kind: input, shape index: {}]
  %s4 = inlined_call_operand.vmem [shape: f32[8,32], index: 4, kind: input, shape index: {}]
  %s5 = inlined_call_operand.<no memory space> [shape: f32[1,1], index: 5, kind: input, shape index: {}]
  %s6 = inlined_call_operand.vmem [shape: f32[24,128], index: 6, kind: output, shape index: {}]
  %s7 = sld [smem:[#allocation0]]
  $region34: #{drn_forward.1} parent=0
    _
  %s9 = ssub.s32 1, %s7
  %s10 = scalar_select 0, %s9, %s7
  %11 = sst [smem:[#allocation2]] %s5
  // Predicated region
  $region2: #{drn_forward.1} parent=0 // pred_check
    _
  $region3: #{drn_forward.1} parent=0 // pred_check_branch
    %13 = sbr.rel (0) target = $region5
  $region4: #{drn_forward.1} parent=0 // pred_region
    _
  $region5: #{drn_forward.1} parent=0 // pred_fallthru
    _
  // Predicated region
  $region6: #{drn_forward.1} parent=0 // pred_check
    _
  $region7: #{drn_forward.1} parent=0 // pred_check_branch
    %15 = sbr.rel (0) target = $region9
  $region8: #{drn_forward.1} parent=0 // pred_region
    _
  $region9: #{drn_forward.1} parent=0 // pred_fallthru
    _
  // Predicated region
  $region10: #{drn_forward.1} parent=0 // pred_check
    _
  $region11: #{drn_forward.1} parent=0 // pred_check_branch
    %17 = sbr.rel (0) target = $region13
  $region12: #{drn_forward.1} parent=0 // pred_region
    _
  $region13: #{drn_forward.1} parent=0 // pred_fallthru
    _
  // Predicated region
  $region14: #{drn_forward.1} parent=0 // pred_check
    _
  $region15: #{drn_forward.1} parent=0 // pred_check_branch
    %19 = sbr.rel (0) target = $region17
  $region16: #{drn_forward.1} parent=0 // pred_region
    _
  $region17: #{drn_forward.1} parent=0 // pred_fallthru
    _
  // Predicated region
  $region18: #{drn_forward.1} parent=0 // pred_check
    _
  $region19: #{drn_forward.1} parent=0 // pred_check_branch
    %21 = sbr.rel (0) target = $region21
  $region20: #{drn_forward.1} parent=0 // pred_region
    _
  $region21: #{drn_forward.1} parent=0 // pred_fallthru
    _
  // Predicated region
  $region22: #{drn_forward.1} parent=0 // pred_check
    _
  $region23: #{drn_forward.1} parent=0 // pred_check_branch
    %23 = sbr.rel (0) target = $region25
  $region24: #{drn_forward.1} parent=0 // pred_region
    _
  $region25: #{drn_forward.1} parent=0 // pred_fallthru
    _
  %v24 = vld [vmem:[%s0] sm:$0xf]
  %s25 = sld [smem:[#allocation2]]
  %v26 = vld [vmem:[%s1 + $0x18] sm:$0xf]
  %28 = vset.pattern.permute.xlu0 0
  %29 = vperm.xlu0 %28, %v26
  %v30 = vpop.permute.xlu0 %29
  %v32 = vmul.f32 %v24, %v30
  %vm33 = vcmask 1043456
  %v34 = vsel %vm33, %v32, 0.0
  %v35 = vrot.slane %v34, 4
  %v36 = vadd.f32 %v34, %v35
  %v37 = vrot.slane %v36, 2
  %v38 = vadd.f32 %v36, %v37
  %v39 = vrot.slane %v38, 1
  %v40 = vadd.f32 %v38, %v39
  %v41 = vstv %s25
  %v42 = vadd.f32 %v40, %v41
  %v43 = vmul.f32 %v42, 0.6666667
  %v44 = vld [vmem:[%s1] sm:$0xff]
  %v45 = vld [vmem:[%s1 + $0x8] sm:$0xff]
  %47 = vset.pattern.permute.xlu0 0
  %48 = vperm.xlu0 %47, %v45
  %v49 = vpop.permute.xlu0 %48
  %v51 = vsub.f32 %v49, %v43
  %v52 = vxor.u32 %v51, 2147483648
  %v53 = vmul.f32 %v52, 1.442695
  %v54 = vpow.pop %v53
  %v55 = vadd.f32 %v54, 1.0
  %v56 = vrcp.pop %v55
  %v57 = vmul.f32 1.0, %v56
  %59 = vset.pattern.permute.xlu0 0
  %60 = vperm.xlu0 %59, %v44
  %v61 = vpop.permute.xlu0 %60
  %v63 = vsub.f32 %v61, %v43
  %v64 = vxor.u32 %v63, 2147483648
  %v65 = vmul.f32 %v64, 1.442695
  %v66 = vpow.pop %v65
  %v67 = vadd.f32 %v66, 1.0
  %v68 = vrcp.pop %v67
  %v69 = vmul.f32 1.0, %v68
  %v70 = vsub.f32 %v57, %v69
  %v71 = vrot.slane %v70, 4
  %v72 = vadd.f32 %v70, %v71
  %v73 = vrot.slane %v72, 2
  %v74 = vadd.f32 %v72, %v73
  %v75 = vrot.slane %v74, 1
  %v76 = vadd.f32 %v74, %v75
  %v77 = vmax.f32 %v70, 1e-10
  %v78 = vmin.f32 %v77, 1.0
  %v79 = vrot.slane %v78, 4
  %v80 = vadd.f32 %v78, %v79
  %v81 = vrot.slane %v80, 2
  %v82 = vadd.f32 %v80, %v81
  %v83 = vrot.slane %v82, 1
  %v84 = vadd.f32 %v82, %v83
  %v85 = vrcp.pop %v84
  %v86 = vmul.f32 %v76, %v85
  %v87 = vmul.f32 %v78, %v86
  %v88 = vld [vmem:[%s1 + $0x20] sm:$0xff]
  %v89 = vld [vmem:[%s1 + $0x28] sm:$0xff]
  %v90 = vld [vmem:[%s1 + $0x30] sm:$0xff]
  %v91 = vld [vmem:[%s1 + $0x38] sm:$0xff]
  %v92 = vld [vmem:[%s1 + $0x40] sm:$0xff]
  %v93 = vld [vmem:[%s1 + $0x48] sm:$0xff]
  %v94 = vld [vmem:[%s1 + $0x50] sm:$0xff]
  %v95 = vld [vmem:[%s1 + $0x58] sm:$0xff]
  %v96 = vld [vmem:[%s1 + $0x10] sm:$0xff]
  %v97 = vld [vmem:[%s2] sm:$0xff]
  %v98 = vld [vmem:[%s2 + $0x8] sm:$0xff]
  %v99 = vld [vmem:[%s2 + $0x10] sm:$0xff]
  %v100 = vld [vmem:[%s2 + $0x18] sm:$0xff]
  %102 = vset.pattern.permute.xlu0 0
  %103 = vperm.xlu0 %102, %v88
  %v104 = vpop.permute.xlu0 %103
  %107 = vset.pattern.permute.xlu0 0
  %108 = vperm.xlu0 %107, %v89
  %v109 = vpop.permute.xlu0 %108
  %112 = vset.pattern.permute.xlu0 0
  %113 = vperm.xlu0 %112, %v90
  %v114 = vpop.permute.xlu0 %113
  %117 = vset.pattern.permute.xlu0 0
  %118 = vperm.xlu0 %117, %v91
  %v119 = vpop.permute.xlu0 %118
  %vm121 = vcmask 31744
  %v123 = vsel %vm121, %v97, 0
  %v126 = vsel %vm121, %v98, 0
  %v129 = vsel %vm121, %v99, 0
  %v132 = vsel %vm121, %v100, 0
  %v135 = vsel %vm33, %v24, 0
  %137 = vmatprep.subr.mxu0 0.0
  %138 = vmatpush1.msra.mxu0 0.0
  %139 = vmatprep.subr.mxu0 0.0
  %140 = vmatpush1.msra.mxu0 0.0
  %141 = vmatprep.subr.mxu0 0.0
  %142 = vmatpush1.msra.mxu0 0.0
  %143 = vmatprep.subr.mxu0 0.0
  %144 = vmatpush1.msra.mxu0 0.0
  %145 = vmatprep.subr.mxu0 0.0
  %146 = vmatpush1.msra.mxu0 0.0
  %147 = vmatprep.subr.mxu0 0.0
  %148 = vmatpush1.msra.mxu0 0.0
  %149 = vmatprep.subr.mxu0 0.0
  %150 = vmatpush1.msra.mxu0 0.0
  %151 = vmatprep.subr.mxu0 0.0
  %152 = vmatpush1.msra.mxu0 0.0
  %153 = vmatprep.subr.mxu0 0.0
  %154 = vmatpush1.msra.mxu0 0.0
  %155 = vmatprep.subr.mxu0 0.0
  %156 = vmatpush1.msra.mxu0 0.0
  %157 = vmatprep.subr.mxu0 0.0
  %158 = vmatpush1.msra.mxu0 0.0
  %159 = vmatprep.subr.mxu0 0.0
  %160 = vmatpush1.msra.mxu0 0.0
  %161 = vmatprep.subr.mxu0 0.0
  %162 = vmatpush1.msra.mxu0 0.0
  %163 = vmatprep.subr.mxu0 0.0
  %164 = vmatpush1.msra.mxu0 0.0
  %165 = vmatprep.subr.mxu0 0.0
  %166 = vmatpush1.msra.mxu0 0.0
  %167 = vmatprep.subr.mxu0 0.0
  %168 = vmatpush1.msra.mxu0 %v135
  %169 = vmatprep.subr.mxu0 0.0
  %170 = vmatpush2.msra.mxu0 0.0
  %171 = vmatprep.subr.mxu0 0.0
  %172 = vmatpush2.msra.mxu0 0.0
  %173 = vmatprep.subr.mxu0 0.0
  %174 = vmatpush2.msra.mxu0 0.0
  %175 = vmatprep.subr.mxu0 0.0
  %176 = vmatpush2.msra.mxu0 0.0
  %177 = vmatprep.subr.mxu0 0.0
  %178 = vmatpush2.msra.mxu0 0.0
  %179 = vmatprep.subr.mxu0 0.0
  %180 = vmatpush2.msra.mxu0 0.0
  %181 = vmatprep.subr.mxu0 0.0
  %182 = vmatpush2.msra.mxu0 0.0
  %183 = vmatprep.subr.mxu0 0.0
  %184 = vmatpush2.msra.mxu0 0.0
  %185 = vmatprep.subr.mxu0 0.0
  %186 = vmatpush2.msra.mxu0 0.0
  %187 = vmatprep.subr.mxu0 0.0
  %188 = vmatpush2.msra.mxu0 0.0
  %189 = vmatprep.subr.mxu0 0.0
  %190 = vmatpush2.msra.mxu0 0.0
  %191 = vmatprep.subr.mxu0 0.0
  %192 = vmatpush2.msra.mxu0 0.0
  %193 = vmatprep.subr.mxu0 0.0
  %194 = vmatpush2.msra.mxu0 0.0
  %195 = vmatprep.subr.mxu0 0.0
  %196 = vmatpush2.msra.mxu0 0.0
  %197 = vmatprep.subr.mxu0 0.0
  %198 = vmatpush2.msra.mxu0 0.0
  %199 = vmatprep.subr.mxu0 0.0
  %200 = vmatpush2.msra.mxu0 0.0
  %201 = vmatprep.mubr.f32.mxu0 0.0
  %202 = vmatmul.mubr.f32.gmra.mxu0 %v123
  %v203 = vpop.f32.mrf.mxu0
  %v204 = vadd.f32 %v104, %v203
  %v205 = vpop.f32.mrf.mxu0
  %206 = vmatprep.mubr.f32.mxu0 0.0
  %207 = vmatmul.mubr.f32.gmra.mxu0 %v126
  %v208 = vpop.f32.mrf.mxu0
  %v209 = vadd.f32 %v109, %v208
  %v210 = vpop.f32.mrf.mxu0
  %211 = vmatprep.mubr.f32.mxu0 0.0
  %212 = vmatmul.mubr.f32.gmra.mxu0 %v129
  %v213 = vpop.f32.mrf.mxu0
  %v214 = vadd.f32 %v114, %v213
  %v215 = vpop.f32.mrf.mxu0
  %216 = vmatprep.mubr.f32.mxu0 0.0
  %217 = vmatmul.mubr.f32.gmra.mxu0 %v132
  %v218 = vpop.f32.mrf.mxu0
  %v219 = vadd.f32 %v119, %v218
  %v220 = vpop.f32.mrf.mxu0
  %221 = vdwg.mxu0
  %v222 = vmul.f32 %v204, 0.01
  %v223 = vmul.f32 %v209, 0.01
  %v224 = vmul.f32 %v214, 0.01
  %v225 = vmul.f32 %v219, 0.01
  %v226 = vmax.f32 %v204, %v222
  %v227 = vmax.f32 %v209, %v223
  %v228 = vmax.f32 %v214, %v224
  %v229 = vmax.f32 %v219, %v225
  %v230 = vld [vmem:[%s3] sm:$0xff]
  %v231 = vld [vmem:[%s3 + $0x8] sm:$0xff]
  %v232 = vld [vmem:[%s3 + $0x10] sm:$0xff]
  %v233 = vld [vmem:[%s3 + $0x18] sm:$0xff]
  %235 = vset.pattern.permute.xlu0 0
  %236 = vperm.xlu0 %235, %v92
  %v237 = vpop.permute.xlu0 %236
  %240 = vset.pattern.permute.xlu0 0
  %241 = vperm.xlu0 %240, %v93
  %v242 = vpop.permute.xlu0 %241
  %245 = vset.pattern.permute.xlu0 0
  %246 = vperm.xlu0 %245, %v94
  %v247 = vpop.permute.xlu0 %246
  %250 = vset.pattern.permute.xlu0 0
  %251 = vperm.xlu0 %250, %v95
  %v252 = vpop.permute.xlu0 %251
  %vm254 = vcmask 261120
  %v256 = vsel %vm254, %v230, 0
  %v259 = vsel %vm254, %v231, 0
  %v262 = vsel %vm254, %v232, 0
  %v265 = vsel %vm254, %v233, 0
  %267 = vmatprep.subr.mxu0 0.0
  %268 = vmatpush1.msra.mxu0 0.0
  %269 = vmatprep.subr.mxu0 0.0
  %270 = vmatpush1.msra.mxu0 0.0
  %271 = vmatprep.subr.mxu0 0.0
  %272 = vmatpush1.msra.mxu0 0.0
  %273 = vmatprep.subr.mxu0 0.0
  %274 = vmatpush1.msra.mxu0 0.0
  %275 = vmatprep.subr.mxu0 0.0
  %276 = vmatpush1.msra.mxu0 0.0
  %277 = vmatprep.subr.mxu0 0.0
  %278 = vmatpush1.msra.mxu0 0.0
  %279 = vmatprep.subr.mxu0 0.0
  %280 = vmatpush1.msra.mxu0 0.0
  %281 = vmatprep.subr.mxu0 0.0
  %282 = vmatpush1.msra.mxu0 0.0
  %283 = vmatprep.subr.mxu0 0.0
  %284 = vmatpush1.msra.mxu0 0.0
  %285 = vmatprep.subr.mxu0 0.0
  %286 = vmatpush1.msra.mxu0 0.0
  %287 = vmatprep.subr.mxu0 0.0
  %288 = vmatpush1.msra.mxu0 0.0
  %289 = vmatprep.subr.mxu0 0.0
  %290 = vmatpush1.msra.mxu0 0.0
  %291 = vmatprep.subr.mxu0 0.0
  %292 = vmatpush1.msra.mxu0 %v229
  %293 = vmatprep.subr.mxu0 0.0
  %294 = vmatpush1.msra.mxu0 %v228
  %295 = vmatprep.subr.mxu0 0.0
  %296 = vmatpush1.msra.mxu0 %v227
  %297 = vmatprep.subr.mxu0 0.0
  %298 = vmatpush1.msra.mxu0 %v226
  %299 = vmatprep.subr.mxu0 0.0
  %300 = vmatpush2.msra.mxu0 0.0
  %301 = vmatprep.subr.mxu0 0.0
  %302 = vmatpush2.msra.mxu0 0.0
  %303 = vmatprep.subr.mxu0 0.0
  %304 = vmatpush2.msra.mxu0 0.0
  %305 = vmatprep.subr.mxu0 0.0
  %306 = vmatpush2.msra.mxu0 0.0
  %307 = vmatprep.subr.mxu0 0.0
  %308 = vmatpush2.msra.mxu0 0.0
  %309 = vmatprep.subr.mxu0 0.0
  %310 = vmatpush2.msra.mxu0 0.0
  %311 = vmatprep.subr.mxu0 0.0
  %312 = vmatpush2.msra.mxu0 0.0
  %313 = vmatprep.subr.mxu0 0.0
  %314 = vmatpush2.msra.mxu0 0.0
  %315 = vmatprep.subr.mxu0 0.0
  %316 = vmatpush2.msra.mxu0 0.0
  %317 = vmatprep.subr.mxu0 0.0
  %318 = vmatpush2.msra.mxu0 0.0
  %319 = vmatprep.subr.mxu0 0.0
  %320 = vmatpush2.msra.mxu0 0.0
  %321 = vmatprep.subr.mxu0 0.0
  %322 = vmatpush2.msra.mxu0 0.0
  %323 = vmatprep.subr.mxu0 0.0
  %324 = vmatpush2.msra.mxu0 0.0
  %325 = vmatprep.subr.mxu0 0.0
  %326 = vmatpush2.msra.mxu0 0.0
  %327 = vmatprep.subr.mxu0 0.0
  %328 = vmatpush2.msra.mxu0 0.0
  %329 = vmatprep.subr.mxu0 0.0
  %330 = vmatpush2.msra.mxu0 0.0
  %331 = vmatprep.mubr.f32.mxu0 0.0
  %332 = vmatmul.mubr.f32.gmra.mxu0 %v256
  %v333 = vpop.f32.mrf.mxu0
  %v334 = vadd.f32 %v237, %v333
  %v335 = vpop.f32.mrf.mxu0
  %336 = vmatprep.mubr.f32.mxu0 0.0
  %337 = vmatmul.mubr.f32.gmra.mxu0 %v259
  %v338 = vpop.f32.mrf.mxu0
  %v339 = vadd.f32 %v242, %v338
  %v340 = vpop.f32.mrf.mxu0
  %341 = vmatprep.mubr.f32.mxu0 0.0
  %342 = vmatmul.mubr.f32.gmra.mxu0 %v262
  %v343 = vpop.f32.mrf.mxu0
  %v344 = vadd.f32 %v247, %v343
  %v345 = vpop.f32.mrf.mxu0
  %346 = vmatprep.mubr.f32.mxu0 0.0
  %347 = vmatmul.mubr.f32.gmra.mxu0 %v265
  %v348 = vpop.f32.mrf.mxu0
  %v349 = vadd.f32 %v252, %v348
  %v350 = vpop.f32.mrf.mxu0
  %351 = vdwg.mxu0
  %v352 = vmul.f32 %v334, 0.01
  %v353 = vmul.f32 %v339, 0.01
  %v354 = vmul.f32 %v344, 0.01
  %v355 = vmul.f32 %v349, 0.01
  %v356 = vmax.f32 %v334, %v352
  %v357 = vmax.f32 %v339, %v353
  %v358 = vmax.f32 %v344, %v354
  %v359 = vmax.f32 %v349, %v355
  %v360 = vld [vmem:[%s4] sm:$0xff]
  %362 = vset.pattern.permute.xlu0 0
  %363 = vperm.xlu0 %362, %v96
  %v364 = vpop.permute.xlu0 %363
  %v367 = vsel %vm254, %v360, 0
  %369 = vmatprep.subr.mxu0 0.0
  %370 = vmatpush1.msra.mxu0 0.0
  %371 = vmatprep.subr.mxu0 0.0
  %372 = vmatpush1.msra.mxu0 0.0
  %373 = vmatprep.subr.mxu0 0.0
  %374 = vmatpush1.msra.mxu0 0.0
  %375 = vmatprep.subr.mxu0 0.0
  %376 = vmatpush1.msra.mxu0 0.0
  %377 = vmatprep.subr.mxu0 0.0
  %378 = vmatpush1.msra.mxu0 0.0
  %379 = vmatprep.subr.mxu0 0.0
  %380 = vmatpush1.msra.mxu0 0.0
  %381 = vmatprep.subr.mxu0 0.0
  %382 = vmatpush1.msra.mxu0 0.0
  %383 = vmatprep.subr.mxu0 0.0
  %384 = vmatpush1.msra.mxu0 0.0
  %385 = vmatprep.subr.mxu0 0.0
  %386 = vmatpush1.msra.mxu0 0.0
  %387 = vmatprep.subr.mxu0 0.0
  %388 = vmatpush1.msra.mxu0 0.0
  %389 = vmatprep.subr.mxu0 0.0
  %390 = vmatpush1.msra.mxu0 0.0
  %391 = vmatprep.subr.mxu0 0.0
  %392 = vmatpush1.msra.mxu0 0.0
  %393 = vmatprep.subr.mxu0 0.0
  %394 = vmatpush1.msra.mxu0 %v359
  %395 = vmatprep.subr.mxu0 0.0
  %396 = vmatpush1.msra.mxu0 %v358
  %397 = vmatprep.subr.mxu0 0.0
  %398 = vmatpush1.msra.mxu0 %v357
  %399 = vmatprep.subr.mxu0 0.0
  %400 = vmatpush1.msra.mxu0 %v356
  %401 = vmatprep.subr.mxu0 0.0
  %402 = vmatpush2.msra.mxu0 0.0
  %403 = vmatprep.subr.mxu0 0.0
  %404 = vmatpush2.msra.mxu0 0.0
  %405 = vmatprep.subr.mxu0 0.0
  %406 = vmatpush2.msra.mxu0 0.0
  %407 = vmatprep.subr.mxu0 0.0
  %408 = vmatpush2.msra.mxu0 0.0
  %409 = vmatprep.subr.mxu0 0.0
  %410 = vmatpush2.msra.mxu0 0.0
  %411 = vmatprep.subr.mxu0 0.0
  %412 = vmatpush2.msra.mxu0 0.0
  %413 = vmatprep.subr.mxu0 0.0
  %414 = vmatpush2.msra.mxu0 0.0
  %415 = vmatprep.subr.mxu0 0.0
  %416 = vmatpush2.msra.mxu0 0.0
  %417 = vmatprep.subr.mxu0 0.0
  %418 = vmatpush2.msra.mxu0 0.0
  %419 = vmatprep.subr.mxu0 0.0
  %420 = vmatpush2.msra.mxu0 0.0
  %421 = vmatprep.subr.mxu0 0.0
  %422 = vmatpush2.msra.mxu0 0.0
  %423 = vmatprep.subr.mxu0 0.0
  %424 = vmatpush2.msra.mxu0 0.0
  %425 = vmatprep.subr.mxu0 0.0
  %426 = vmatpush2.msra.mxu0 0.0
  %427 = vmatprep.subr.mxu0 0.0
  %428 = vmatpush2.msra.mxu0 0.0
  %429 = vmatprep.subr.mxu0 0.0
  %430 = vmatpush2.msra.mxu0 0.0
  %431 = vmatprep.subr.mxu0 0.0
  %432 = vmatpush2.msra.mxu0 0.0
  %433 = vmatprep.mubr.f32.mxu0 0.0
  %434 = vmatmul.mubr.f32.gmra.mxu0 %v367
  %v435 = vpop.f32.mrf.mxu0
  %v436 = vadd.f32 %v364, %v435
  %v437 = vpop.f32.mrf.mxu0
  %438 = vdwg.mxu0
  %v439 = vrot.slane %v436, 4
  %v440 = vmax.f32 %v436, %v439
  %v441 = vrot.slane %v440, 2
  %v442 = vmax.f32 %v440, %v441
  %v443 = vrot.slane %v442, 1
  %v444 = vmax.f32 %v442, %v443
  %v445 = vsub.f32 %v436, %v444
  %v446 = vmul.f32 %v445, 1.442695
  %v447 = vpow.pop %v446
  %v448 = vmul.f32 %v87, %v447
  %v449 = vrot.slane %v448, 4
  %v450 = vadd.f32 %v448, %v449
  %v451 = vrot.slane %v450, 2
  %v452 = vadd.f32 %v450, %v451
  %v453 = vrot.slane %v452, 1
  %v454 = vadd.f32 %v452, %v453
  %v455 = vrcp.pop %v454
  %v456 = vmul.f32 %v448, %v455
  %457 = vst [vmem:[%s6] sm:$0xff] %v87
  %458 = vst [vmem:[%s6 + $0x8] sm:$0xff] %v456
  %459 = vst [vmem:[%s6 + $0x10] sm:$0xff] %v42
  // Predicated region
  $region26: #{drn_forward.1} parent=0 // pred_check
    _
  $region27: #{drn_forward.1} parent=0 // pred_check_branch
    %461 = sbr.rel (0) target = $region29
  $region28: #{drn_forward.1} parent=0 // pred_region
    _
  $region29: #{drn_forward.1} parent=0 // pred_fallthru
    _
  // Predicated region
  $region30: #{drn_forward.1} parent=0 // pred_check
    _
  $region31: #{drn_forward.1} parent=0 // pred_check_branch
    %463 = sbr.rel (0) target = $region33
  $region32: #{drn_forward.1} parent=0 // pred_region
    _
  $region33: #{drn_forward.1} parent=0 // pred_fallthru
    _

</llo_original>
